<compile_context>
chip_gen: v6e
topology: v6e:2x2x1
jax: 0.10.0
libtpu: 0.0.40
codegen_flags: <defaults>
</compile_context>

<pallas_src>
import functools

import jax
import jax.numpy as jnp
from jax.experimental import pallas as pl
from jax.experimental.pallas import tpu as pltpu


def _maxpool_kernel(x_ref, o_ref, *, kernel_size, h_out, w_out):
    # x_ref: (H, W, C_TILE) channels-last tile; o_ref: (H_out, W_out, C_TILE).
    # W-direction (sublane-dim) k-wide max: shifted windows loaded from the ref.
    m = x_ref[:, 0:w_out, :]
    for dw in range(1, kernel_size):
        m = jnp.maximum(m, x_ref[:, dw:dw + w_out, :])
    # H-direction (leading-dim) k-wide max: leading-dim slices are free.
    out = m[0:h_out]
    for dh in range(1, kernel_size):
        out = jnp.maximum(out, m[dh:dh + h_out])
    o_ref[...] = out


def maxpool2d(x, kernel_size=3, stride=1, padding=0):
    """MaxPool2d forward matching nn.MaxPool2d(k, stride=1, padding=p, ceil_mode=True).

    Only stride=1 is supported (the module's configuration).
    x: (N, C, H, W)
    """
    assert stride == 1, "kernel implemented for stride=1 (module default)"
    n, c, h, w = x.shape

    if padding > 0:
        # Pad with the dtype's minimum so padded cells never win the max.
        if jnp.issubdtype(x.dtype, jnp.floating):
            pad_val = -jnp.inf
        else:
            pad_val = jnp.iinfo(x.dtype).min
        x = jnp.pad(x, ((0, 0), (0, 0), (padding, padding), (padding, padding)),
                    constant_values=pad_val)
        h = h + 2 * padding
        w = w + 2 * padding

    # ceil_mode with stride=1: ceil((h - k)/1) + 1 == h - k + 1 (same as floor).
    h_out = h - kernel_size + 1
    w_out = w - kernel_size + 1
    assert h_out >= 1 and w_out >= 1

    # --- channels-last, lane-dense layout ---------------------------------
    nc = n * c
    x_cl = jnp.transpose(x, (2, 3, 0, 1)).reshape(h, w, nc)   # (H, W, N*C)

    dtype_bytes = jnp.dtype(x.dtype).itemsize
    per_c = (h * w + h_out * w_out) * dtype_bytes              # bytes per channel (in+out)
    nc_128 = pl.cdiv(nc, 128) * 128                            # minimum lane-padded channels

    # Size C_TILE so double-buffered (input + output) blocks stay ~<= 16 MiB.
    budget = 16 * 1024 * 1024
    c_tile = (budget // (2 * per_c)) // 128 * 128
    c_tile = max(128, min(c_tile, nc_128))
    # Prefer >= 2 grid steps so v7x's two TensorCores both get work.
    if c_tile == nc_128 and nc_128 >= 256:
        c_tile = ((nc_128 // 2) + 127) // 128 * 128

    c_pad = pl.cdiv(nc, c_tile) * c_tile
    if c_pad > nc:
        x_cl = jnp.pad(x_cl, ((0, 0), (0, 0), (0, c_pad - nc)))
    grid = c_pad // c_tile

    block_bytes = 2 * per_c * c_tile                           # double-buffered in+out blocks
    vmem_limit = int(min(64 * 1024 * 1024,
                         max(32 * 1024 * 1024, int(block_bytes * 1.5))))

    # NOTE: whole (H, W) planes are kept resident per block; for very large
    # feature maps an H-tiled variant with a (k-1)-row halo would be needed,
    # but SqueezeSeg-scale planes fit comfortably.

    kernel = functools.partial(
        _maxpool_kernel, kernel_size=kernel_size, h_out=h_out, w_out=w_out)

    out_cl = pl.pallas_call(
        kernel,
        out_shape=jax.ShapeDtypeStruct((h_out, w_out, c_pad), x.dtype),
        grid_spec=pltpu.PrefetchScalarGridSpec(
            num_scalar_prefetch=0,
            grid=(grid,),
            in_specs=[pl.BlockSpec((h, w, c_tile), lambda i: (0, 0, i))],
            out_specs=pl.BlockSpec((h_out, w_out, c_tile), lambda i: (0, 0, i)),
        ),
        compiler_params=pltpu.CompilerParams(
            dimension_semantics=("parallel",),
            vmem_limit_bytes=vmem_limit),
    )(x_cl)

    # Drop channel padding, restore NCHW.
    out_cl = out_cl[:, :, :nc]
    out = out_cl.reshape(h_out, w_out, n, c).transpose(2, 3, 0, 1)
    return out


def _maxpool_ref(x, kernel_size=3):
    # Pure-JAX reference (stride=1, padding=0).
    n, c, h, w = x.shape
    h_out = h - kernel_size + 1
    w_out = w - kernel_size + 1
    out = jnp.full((n, c, h_out, w_out), -jnp.inf, dtype=x.dtype)
    for dh in range(kernel_size):
        for dw in range(kernel_size):
            out = jnp.maximum(out, x[:, :, dh:dh + h_out, dw:dw + w_out])
    return out


if __name__ == "__main__":
    key = jax.random.PRNGKey(0)
    x = jax.random.normal(key, (2, 4, 16, 16), dtype=jnp.float32)

    out = maxpool2d(x, kernel_size=3, stride=1, padding=0)
    out = jax.block_until_ready(out)

    ref = _maxpool_ref(x, kernel_size=3)
    assert out.shape == (2, 4, 14, 14), out.shape
    assert jnp.allclose(out, ref), "mismatch vs reference"

    print("KERNEL_OK")
</pallas_src>

<mosaic_0001>
module attributes {stable_mosaic.version = 11 : i64} {
  func.func @_maxpool_kernel(%arg0: i32, %arg1: memref<16x16x128xf32, #tpu.memory_space<vmem>>, %arg2: memref<14x14x128xf32, #tpu.memory_space<vmem>>) attributes {dimension_semantics = [#tpu.dimension_semantics<parallel>], iteration_bounds = array<i64: 1>, scalar_prefetch = 0 : i64, scratch_operands = 0 : i64, tpu.core_type = #tpu.core_type<tc>, window_params = [{transform_indices = @transform_0, window_bounds = array<i64: 16, 16, 128>}, {transform_indices = @transform_1, window_bounds = array<i64: 14, 14, 128>}]} {
    %c0 = arith.constant 0 : index
    %c0_0 = arith.constant 0 : index
    %c0_1 = arith.constant 0 : index
    %0 = vector.load %arg1[%c0, %c0_0, %c0_1] : memref<16x16x128xf32, #tpu.memory_space<vmem>>, vector<16x14x128xf32>
    %c0_2 = arith.constant 0 : index
    %c1 = arith.constant 1 : index
    %c0_3 = arith.constant 0 : index
    %1 = vector.load %arg1[%c0_2, %c1, %c0_3] : memref<16x16x128xf32, #tpu.memory_space<vmem>>, vector<16x14x128xf32>
    %2 = arith.maximumf %0, %1 : vector<16x14x128xf32>
    %c0_4 = arith.constant 0 : index
    %c2 = arith.constant 2 : index
    %c0_5 = arith.constant 0 : index
    %3 = vector.load %arg1[%c0_4, %c2, %c0_5] : memref<16x16x128xf32, #tpu.memory_space<vmem>>, vector<16x14x128xf32>
    %4 = arith.maximumf %2, %3 : vector<16x14x128xf32>
    %5 = vector.extract_strided_slice %4 {offsets = [0, 0, 0], sizes = [14, 14, 128], strides = [1, 1, 1]} : vector<16x14x128xf32> to vector<14x14x128xf32>
    %6 = vector.extract_strided_slice %4 {offsets = [1, 0, 0], sizes = [14, 14, 128], strides = [1, 1, 1]} : vector<16x14x128xf32> to vector<14x14x128xf32>
    %7 = arith.maximumf %5, %6 : vector<14x14x128xf32>
    %8 = vector.extract_strided_slice %4 {offsets = [2, 0, 0], sizes = [14, 14, 128], strides = [1, 1, 1]} : vector<16x14x128xf32> to vector<14x14x128xf32>
    %9 = arith.maximumf %7, %8 : vector<14x14x128xf32>
    %c0_6 = arith.constant 0 : index
    %c0_7 = arith.constant 0 : index
    %c0_8 = arith.constant 0 : index
    %10 = vector.load %arg2[%c0_6, %c0_7, %c0_8] : memref<14x14x128xf32, #tpu.memory_space<vmem>>, vector<14x14x128xf32>
    tpu.vector_store %arg2[%c0_6, %c0_7, %c0_8], %9 {strides = array<i32>} : memref<14x14x128xf32, #tpu.memory_space<vmem>>, vector<14x14x128xf32>,
    return
  }
  func.func @transform_0(%arg0: i32) -> (i32, i32, i32) {
    %c0_i32 = arith.constant 0 : i32
    %c0_i32_0 = arith.constant 0 : i32
    %c0_i32_1 = arith.constant 0 : i32
    return %c0_i32, %c0_i32_0, %arg0 : i32, i32, i32
  }
  func.func @transform_1(%arg0: i32) -> (i32, i32, i32) {
    %c0_i32 = arith.constant 0 : i32
    %c0_i32_0 = arith.constant 0 : i32
    %c0_i32_1 = arith.constant 0 : i32
    return %c0_i32, %c0_i32_0, %arg0 : i32, i32, i32
  }
}

</mosaic_0001>

<llo_original>
// kernel: tpu_custom_call.1
$region0: #{tpu_custom_call.1}
  #allocation0 [shape = 'u32[]', space=smem, size = 0x4, offset = 0x4, fixed_abs, tag = 'smem constant byte address 0x4 - core index']
  #allocation1 [shape = 'u32[144,128]{1,0:T(1,128)}', space=vmem, size = 0x12000, scoped, tag = 'internal scratch']
  %s0 = inlined_call_operand.hbm [shape: f32[16,16,128], index: 0, kind: input, shape index: {}]
  %s1 = inlined_call_operand.hbm [shape: f32[14,14,128], index: 1, kind: output, shape index: {}]
  %s2 = sld [smem:[#allocation0]]
  $region18: #{tpu_custom_call.1} parent=0
    _
  %s4 = ssub.s32 1, %s2
  %s5 = scalar_select 0, %s4, %s2
  $region1: #{tpu_custom_call.1} parent=0
    #allocation2 [shape = 'u8[131072]{0}', space=vmem, size = 0x20000, scoped, tag = 'input window, operand 0, single buffered']
    #allocation3 [shape = 's32[1]{0}', space=sflag, size = 0x4, scoped, tag = 'scoped memory for tpu_custom_call.1']
    #allocation4 [shape = 's32[1]{0}', space=sflag, size = 0x4, scoped, tag = 'scoped memory for tpu_custom_call.1']
    #allocation5 [shape = 'u8[114688]{0}', space=vmem, size = 0x1c000, scoped, tag = 'output window, operand 0, single buffered']
    %6 = vsyncpa [#allocation3], 0
    %7 = vsyncpa [#allocation4], 0
    // Predicated region
    $region2: #{tpu_custom_call.1} parent=1 // pred_check
      _
    $region3: #{tpu_custom_call.1} parent=1 // pred_check_branch
      %9 = sbr.rel (0) target = $region5
    $region4: #{tpu_custom_call.1} parent=1 // pred_region
      %s11 = ssub.s32 4096, 4096
      %12 = vsyncadd [#allocation3], %s11
      %s13 = sshll.u32 [#allocation2], 4
      %s14 = int_to_ptr.vmem [resolvable:$true] %s13
      %19 = dma.hbm_to_vmem [thread:$0]  %s0, 4096, %s14, [#allocation3], 128, 128, 8
    $region5: #{tpu_custom_call.1} parent=1 // pred_fallthru
      _
    // Predicated region
    $region6: #{tpu_custom_call.1} parent=1 // pred_check
      _
    $region7: #{tpu_custom_call.1} parent=1 // pred_check_branch
      %21 = sbr.rel (0) target = $region9
    $region8: #{tpu_custom_call.1} parent=1 // pred_region
      %22 = dma.done [#allocation3], 4096
    $region9: #{tpu_custom_call.1} parent=1 // pred_fallthru
      _
    %v23 = vld [vmem:[#allocation2] sm:$0xff]
    %v24 = vld [vmem:[#allocation2 + $0x8] sm:$0x3f]
    %v25 = vld [vmem:[#allocation2 + $0x10] sm:$0xff]
    %v26 = vld [vmem:[#allocation2 + $0x18] sm:$0x3f]
    %v27 = vld [vmem:[#allocation2 + $0x20] sm:$0xff]
    %v28 = vld [vmem:[#allocation2 + $0x28] sm:$0x3f]
    %v29 = vld [vmem:[#allocation2 + $0x30] sm:$0xff]
    %v30 = vld [vmem:[#allocation2 + $0x38] sm:$0x3f]
    %v31 = vld [vmem:[#allocation2 + $0x40] sm:$0xff]
    %v32 = vld [vmem:[#allocation2 + $0x48] sm:$0x3f]
    %v33 = vld [vmem:[#allocation2 + $0x50] sm:$0xff]
    %v34 = vld [vmem:[#allocation2 + $0x58] sm:$0x3f]
    %v35 = vld [vmem:[#allocation2 + $0x60] sm:$0xff]
    %v36 = vld [vmem:[#allocation2 + $0x68] sm:$0x3f]
    %v37 = vld [vmem:[#allocation2 + $0x70] sm:$0xff]
    %v38 = vld [vmem:[#allocation2 + $0x78] sm:$0x3f]
    %v39 = vld [vmem:[#allocation2 + $0x80] sm:$0xff]
    %v40 = vld [vmem:[#allocation2 + $0x88] sm:$0x3f]
    %v41 = vld [vmem:[#allocation2 + $0x90] sm:$0xff]
    %v42 = vld [vmem:[#allocation2 + $0x98] sm:$0x3f]
    %v43 = vld [vmem:[#allocation2 + $0xa0] sm:$0xff]
    %v44 = vld [vmem:[#allocation2 + $0xa8] sm:$0x3f]
    %v45 = vld [vmem:[#allocation2 + $0xb0] sm:$0xff]
    %v46 = vld [vmem:[#allocation2 + $0xb8] sm:$0x3f]
    %v47 = vld [vmem:[#allocation2 + $0xc0] sm:$0xff]
    %v48 = vld [vmem:[#allocation2 + $0xc8] sm:$0x3f]
    %v49 = vld [vmem:[#allocation2 + $0xd0] sm:$0xff]
    %v50 = vld [vmem:[#allocation2 + $0xd8] sm:$0x3f]
    %v51 = vld [vmem:[#allocation2 + $0xe0] sm:$0xff]
    %v52 = vld [vmem:[#allocation2 + $0xe8] sm:$0x3f]
    %v53 = vld [vmem:[#allocation2 + $0xf0] sm:$0xff]
    %v54 = vld [vmem:[#allocation2 + $0xf8] sm:$0x3f]
    %v55 = vld [vmem:[#allocation2 + $0x1] sm:$0xff]
    %v56 = vld [vmem:[#allocation2 + $0x9] sm:$0x3f]
    %v57 = vld [vmem:[#allocation2 + $0x11] sm:$0xff]
    %v58 = vld [vmem:[#allocation2 + $0x19] sm:$0x3f]
    %v59 = vld [vmem:[#allocation2 + $0x21] sm:$0xff]
    %v60 = vld [vmem:[#allocation2 + $0x29] sm:$0x3f]
    %v61 = vld [vmem:[#allocation2 + $0x31] sm:$0xff]
    %v62 = vld [vmem:[#allocation2 + $0x39] sm:$0x3f]
    %v63 = vld [vmem:[#allocation2 + $0x41] sm:$0xff]
    %v64 = vld [vmem:[#allocation2 + $0x49] sm:$0x3f]
    %v65 = vld [vmem:[#allocation2 + $0x51] sm:$0xff]
    %v66 = vld [vmem:[#allocation2 + $0x59] sm:$0x3f]
    %v67 = vld [vmem:[#allocation2 + $0x61] sm:$0xff]
    %v68 = vld [vmem:[#allocation2 + $0x69] sm:$0x3f]
    %v69 = vld [vmem:[#allocation2 + $0x71] sm:$0xff]
    %v70 = vld [vmem:[#allocation2 + $0x79] sm:$0x3f]
    %v71 = vld [vmem:[#allocation2 + $0x81] sm:$0xff]
    %v72 = vld [vmem:[#allocation2 + $0x89] sm:$0x3f]
    %v73 = vld [vmem:[#allocation2 + $0x91] sm:$0xff]
    %v74 = vld [vmem:[#allocation2 + $0x99] sm:$0x3f]
    %v75 = vld [vmem:[#allocation2 + $0xa1] sm:$0xff]
    %v76 = vld [vmem:[#allocation2 + $0xa9] sm:$0x3f]
    %v77 = vld [vmem:[#allocation2 + $0xb1] sm:$0xff]
    %v78 = vld [vmem:[#allocation2 + $0xb9] sm:$0x3f]
    %v79 = vld [vmem:[#allocation2 + $0xc1] sm:$0xff]
    %v80 = vld [vmem:[#allocation2 + $0xc9] sm:$0x3f]
    %v81 = vld [vmem:[#allocation2 + $0xd1] sm:$0xff]
    %v82 = vld [vmem:[#allocation2 + $0xd9] sm:$0x3f]
    %v83 = vld [vmem:[#allocation2 + $0xe1] sm:$0xff]
    %v84 = vld [vmem:[#allocation2 + $0xe9] sm:$0x3f]
    %v85 = vld [vmem:[#allocation2 + $0xf1] sm:$0xff]
    %v86 = vld [vmem:[#allocation2 + $0xf9] sm:$0x3f]
    %v87 = vmax.f32 %v23, %v55
    %v88 = vmax.f32 %v24, %v56
    %v89 = vmax.f32 %v25, %v57
    %v90 = vmax.f32 %v26, %v58
    %v91 = vmax.f32 %v27, %v59
    %v92 = vmax.f32 %v28, %v60
    %v93 = vmax.f32 %v29, %v61
    %v94 = vmax.f32 %v30, %v62
    %v95 = vmax.f32 %v31, %v63
    %v96 = vmax.f32 %v32, %v64
    %v97 = vmax.f32 %v33, %v65
    %v98 = vmax.f32 %v34, %v66
    %v99 = vmax.f32 %v35, %v67
    %v100 = vmax.f32 %v36, %v68
    %v101 = vmax.f32 %v37, %v69
    %v102 = vmax.f32 %v38, %v70
    %v103 = vmax.f32 %v39, %v71
    %v104 = vmax.f32 %v40, %v72
    %v105 = vmax.f32 %v41, %v73
    %v106 = vmax.f32 %v42, %v74
    %v107 = vmax.f32 %v43, %v75
    %v108 = vmax.f32 %v44, %v76
    %v109 = vmax.f32 %v45, %v77
    %v110 = vmax.f32 %v46, %v78
    %v111 = vmax.f32 %v47, %v79
    %v112 = vmax.f32 %v48, %v80
    %v113 = vmax.f32 %v49, %v81
    %v114 = vmax.f32 %v50, %v82
    %v115 = vmax.f32 %v51, %v83
    %v116 = vmax.f32 %v52, %v84
    %v117 = vmax.f32 %v53, %v85
    %v118 = vmax.f32 %v54, %v86
    %v119 = vld [vmem:[#allocation2 + $0x2] sm:$0xff]
    %v120 = vld [vmem:[#allocation2 + $0xa] sm:$0x3f]
    %v121 = vld [vmem:[#allocation2 + $0x12] sm:$0xff]
    %v122 = vld [vmem:[#allocation2 + $0x1a] sm:$0x3f]
    %v123 = vld [vmem:[#allocation2 + $0x22] sm:$0xff]
    %v124 = vld [vmem:[#allocation2 + $0x2a] sm:$0x3f]
    %v125 = vld [vmem:[#allocation2 + $0x32] sm:$0xff]
    %v126 = vld [vmem:[#allocation2 + $0x3a] sm:$0x3f]
    %v127 = vld [vmem:[#allocation2 + $0x42] sm:$0xff]
    %v128 = vld [vmem:[#allocation2 + $0x4a] sm:$0x3f]
    %v129 = vld [vmem:[#allocation2 + $0x52] sm:$0xff]
    %v130 = vld [vmem:[#allocation2 + $0x5a] sm:$0x3f]
    %v131 = vld [vmem:[#allocation2 + $0x62] sm:$0xff]
    %v132 = vld [vmem:[#allocation2 + $0x6a] sm:$0x3f]
    %v133 = vld [vmem:[#allocation2 + $0x72] sm:$0xff]
    %v134 = vld [vmem:[#allocation2 + $0x7a] sm:$0x3f]
    %v135 = vld [vmem:[#allocation2 + $0x82] sm:$0xff]
    %v136 = vld [vmem:[#allocation2 + $0x8a] sm:$0x3f]
    %v137 = vld [vmem:[#allocation2 + $0x92] sm:$0xff]
    %v138 = vld [vmem:[#allocation2 + $0x9a] sm:$0x3f]
    %v139 = vld [vmem:[#allocation2 + $0xa2] sm:$0xff]
    %v140 = vld [vmem:[#allocation2 + $0xaa] sm:$0x3f]
    %v141 = vld [vmem:[#allocation2 + $0xb2] sm:$0xff]
    %v142 = vld [vmem:[#allocation2 + $0xba] sm:$0x3f]
    %v143 = vld [vmem:[#allocation2 + $0xc2] sm:$0xff]
    %v144 = vld [vmem:[#allocation2 + $0xca] sm:$0x3f]
    %v145 = vld [vmem:[#allocation2 + $0xd2] sm:$0xff]
    %v146 = vld [vmem:[#allocation2 + $0xda] sm:$0x3f]
    %v147 = vld [vmem:[#allocation2 + $0xe2] sm:$0xff]
    %v148 = vld [vmem:[#allocation2 + $0xea] sm:$0x3f]
    %v149 = vld [vmem:[#allocation2 + $0xf2] sm:$0xff]
    %v150 = vld [vmem:[#allocation2 + $0xfa] sm:$0x3f]
    %v151 = vmax.f32 %v87, %v119
    %v152 = vmax.f32 %v88, %v120
    %v153 = vmax.f32 %v89, %v121
    %v154 = vmax.f32 %v90, %v122
    %v155 = vmax.f32 %v91, %v123
    %v156 = vmax.f32 %v92, %v124
    %v157 = vmax.f32 %v93, %v125
    %v158 = vmax.f32 %v94, %v126
    %v159 = vmax.f32 %v95, %v127
    %v160 = vmax.f32 %v96, %v128
    %v161 = vmax.f32 %v97, %v129
    %v162 = vmax.f32 %v98, %v130
    %v163 = vmax.f32 %v99, %v131
    %v164 = vmax.f32 %v100, %v132
    %v165 = vmax.f32 %v101, %v133
    %v166 = vmax.f32 %v102, %v134
    %v167 = vmax.f32 %v103, %v135
    %v168 = vmax.f32 %v104, %v136
    %v169 = vmax.f32 %v105, %v137
    %v170 = vmax.f32 %v106, %v138
    %v171 = vmax.f32 %v107, %v139
    %v172 = vmax.f32 %v108, %v140
    %v173 = vmax.f32 %v109, %v141
    %v174 = vmax.f32 %v110, %v142
    %v175 = vmax.f32 %v111, %v143
    %v176 = vmax.f32 %v112, %v144
    %v177 = vmax.f32 %v113, %v145
    %v178 = vmax.f32 %v114, %v146
    %v179 = vmax.f32 %v115, %v147
    %v180 = vmax.f32 %v116, %v148
    %v181 = vmax.f32 %v117, %v149
    %v182 = vmax.f32 %v118, %v150
    %v183 = vmax.f32 %v151, %v153
    %v184 = vmax.f32 %v152, %v154
    %v185 = vmax.f32 %v153, %v155
    %v186 = vmax.f32 %v154, %v156
    %v187 = vmax.f32 %v155, %v157
    %v188 = vmax.f32 %v156, %v158
    %v189 = vmax.f32 %v157, %v159
    %v190 = vmax.f32 %v158, %v160
    %v191 = vmax.f32 %v159, %v161
    %v192 = vmax.f32 %v160, %v162
    %v193 = vmax.f32 %v161, %v163
    %v194 = vmax.f32 %v162, %v164
    %v195 = vmax.f32 %v163, %v165
    %v196 = vmax.f32 %v164, %v166
    %v197 = vmax.f32 %v165, %v167
    %v198 = vmax.f32 %v166, %v168
    %v199 = vmax.f32 %v167, %v169
    %v200 = vmax.f32 %v168, %v170
    %v201 = vmax.f32 %v169, %v171
    %v202 = vmax.f32 %v170, %v172
    %v203 = vmax.f32 %v171, %v173
    %v204 = vmax.f32 %v172, %v174
    %v205 = vmax.f32 %v173, %v175
    %v206 = vmax.f32 %v174, %v176
    %v207 = vmax.f32 %v175, %v177
    %v208 = vmax.f32 %v176, %v178
    %v209 = vmax.f32 %v177, %v179
    %v210 = vmax.f32 %v178, %v180
    %v211 = vmax.f32 %v183, %v155
    %v212 = vmax.f32 %v184, %v156
    %v213 = vmax.f32 %v185, %v157
    %v214 = vmax.f32 %v186, %v158
    %v215 = vmax.f32 %v187, %v159
    %v216 = vmax.f32 %v188, %v160
    %v217 = vmax.f32 %v189, %v161
    %v218 = vmax.f32 %v190, %v162
    %v219 = vmax.f32 %v191, %v163
    %v220 = vmax.f32 %v192, %v164
    %v221 = vmax.f32 %v193, %v165
    %v222 = vmax.f32 %v194, %v166
    %v223 = vmax.f32 %v195, %v167
    %v224 = vmax.f32 %v196, %v168
    %v225 = vmax.f32 %v197, %v169
    %v226 = vmax.f32 %v198, %v170
    %v227 = vmax.f32 %v199, %v171
    %v228 = vmax.f32 %v200, %v172
    %v229 = vmax.f32 %v201, %v173
    %v230 = vmax.f32 %v202, %v174
    %v231 = vmax.f32 %v203, %v175
    %v232 = vmax.f32 %v204, %v176
    %v233 = vmax.f32 %v205, %v177
    %v234 = vmax.f32 %v206, %v178
    %v235 = vmax.f32 %v207, %v179
    %v236 = vmax.f32 %v208, %v180
    %v237 = vmax.f32 %v209, %v181
    %v238 = vmax.f32 %v210, %v182
    %239 = vst [vmem:[#allocation5] sm:$0xff] %v211
    %240 = vst [vmem:[#allocation5 + $0x8] sm:$0x3f] %v212
    %241 = vst [vmem:[#allocation5 + $0x10] sm:$0xff] %v213
    %242 = vst [vmem:[#allocation5 + $0x18] sm:$0x3f] %v214
    %243 = vst [vmem:[#allocation5 + $0x20] sm:$0xff] %v215
    %244 = vst [vmem:[#allocation5 + $0x28] sm:$0x3f] %v216
    %245 = vst [vmem:[#allocation5 + $0x30] sm:$0xff] %v217
    %246 = vst [vmem:[#allocation5 + $0x38] sm:$0x3f] %v218
    %247 = vst [vmem:[#allocation5 + $0x40] sm:$0xff] %v219
    %248 = vst [vmem:[#allocation5 + $0x48] sm:$0x3f] %v220
    %249 = vst [vmem:[#allocation5 + $0x50] sm:$0xff] %v221
    %250 = vst [vmem:[#allocation5 + $0x58] sm:$0x3f] %v222
    %251 = vst [vmem:[#allocation5 + $0x60] sm:$0xff] %v223
    %252 = vst [vmem:[#allocation5 + $0x68] sm:$0x3f] %v224
    %253 = vst [vmem:[#allocation5 + $0x70] sm:$0xff] %v225
    %254 = vst [vmem:[#allocation5 + $0x78] sm:$0x3f] %v226
    %255 = vst [vmem:[#allocation5 + $0x80] sm:$0xff] %v227
    %256 = vst [vmem:[#allocation5 + $0x88] sm:$0x3f] %v228
    %257 = vst [vmem:[#allocation5 + $0x90] sm:$0xff] %v229
    %258 = vst [vmem:[#allocation5 + $0x98] sm:$0x3f] %v230
    %259 = vst [vmem:[#allocation5 + $0xa0] sm:$0xff] %v231
    %260 = vst [vmem:[#allocation5 + $0xa8] sm:$0x3f] %v232
    %261 = vst [vmem:[#allocation5 + $0xb0] sm:$0xff] %v233
    %262 = vst [vmem:[#allocation5 + $0xb8] sm:$0x3f] %v234
    %263 = vst [vmem:[#allocation5 + $0xc0] sm:$0xff] %v235
    %264 = vst [vmem:[#allocation5 + $0xc8] sm:$0x3f] %v236
    %265 = vst [vmem:[#allocation5 + $0xd0] sm:$0xff] %v237
    %266 = vst [vmem:[#allocation5 + $0xd8] sm:$0x3f] %v238
    // Predicated region
    $region10: #{tpu_custom_call.1} parent=1 // pred_check
      _
    $region11: #{tpu_custom_call.1} parent=1 // pred_check_branch
      %268 = sbr.rel (0) target = $region13
    $region12: #{tpu_custom_call.1} parent=1 // pred_region
      %s270 = ssub.s32 3584, 3584
      %271 = vsyncadd [#allocation4], %s270
      %s272 = sshll.u32 [#allocation5], 4
      %s273 = int_to_ptr.vmem [resolvable:$true] %s272
      %278 = dma.vmem_to_hbm [thread:$0]  %s273, 3584, %s1, [#allocation4], 128, 128, 8
    $region13: #{tpu_custom_call.1} parent=1 // pred_fallthru
      _
    // Predicated region
    $region14: #{tpu_custom_call.1} parent=1 // pred_check
      _
    $region15: #{tpu_custom_call.1} parent=1 // pred_check_branch
      %280 = sbr.rel (0) target = $region17
    $region16: #{tpu_custom_call.1} parent=1 // pred_region
      %281 = dma.done [#allocation4], 3584
    $region17: #{tpu_custom_call.1} parent=1 // pred_fallthru
      _
    %282 = vsyncpa [#allocation3], 1
    %283 = vsyncpa [#allocation4], 1

</llo_original>
